<compile_context>
chip_gen: v7x
topology: tpu7x:2x2x1
jax: 0.10.0
libtpu: 0.0.40
codegen_flags: <defaults>
</compile_context>

<pallas_src>
import jax
import jax.numpy as jnp
import numpy as np
from jax.experimental import pallas as pl
from jax.experimental.pallas import tpu as pltpu

# ---- problem sizes (small, consistent with the module) ----
N, IC, L = 2, 4, 16          # batch, in channels, length
OC, KS, S = 8, 3, 2          # out channels, kernel size, stride
PAD = KS // 2
L_OUT = (L + 2 * PAD - KS) // S + 1
EPS = 1e-5

M = N * L_OUT                # real number of output columns (batch x out positions)
M_PAD = 128                  # lane-dense column width (multiple of 128)
K_PAD = 16                   # contraction dim IC*KS=12 padded to a multiple of 8 sublanes


def convblock_kernel(xcol_ref, w_ref, gb_ref, o_ref):
    # xcol_ref: (K_PAD, M_PAD)  -- zero-padded beyond the first IC*KS rows / M columns
    # w_ref   : (OC, K_PAD)     -- zero-padded beyond the first IC*KS columns
    # gb_ref  : (OC, 2)         -- column 0 = gamma, column 1 = beta
    # o_ref   : (OC, M_PAD)
    #
    # Conv1d as a matmul over (in_channel, tap) pairs -> MXU. No bias: it cancels
    # under training-mode BN, and its absence keeps the padded columns exactly zero.
    y = jnp.dot(w_ref[...], xcol_ref[...], preferred_element_type=jnp.float32)

    # One-pass per-channel batch stats over the real M columns. Padded columns of y
    # are exactly 0 (W @ 0 = 0), so they contribute nothing to sum / sum-of-squares.
    # NOTE: only valid for training-mode BN (biased variance) with the bias folded out.
    inv_m = jnp.float32(1.0 / M)                      # trace-time constant
    s = jnp.sum(y, axis=1, keepdims=True)             # (OC, 1)
    ss = jnp.sum(y * y, axis=1, keepdims=True)        # (OC, 1)
    mean = s * inv_m
    var = jnp.maximum(ss * inv_m - mean * mean, 0.0)  # clamp tiny negative cancellation

    gb = gb_ref[...]                                  # (OC, 2), single tiny DMA
    gamma = gb[:, 0:1]
    beta = gb[:, 1:2]

    # Fused BN affine: one multiply + one add per element of the big tile.
    scale = gamma * jax.lax.rsqrt(var + EPS)          # (OC, 1), rsqrt -> EUP slot
    shift = beta - mean * scale                       # (OC, 1)

    # ReLU. Padded columns hold max(shift, 0) garbage; wrapper slices them off.
    o_ref[...] = jnp.maximum(y * scale + shift, 0.0).astype(o_ref.dtype)


@jax.jit
def conv_block(x, w, b, gamma, beta):
    """x: (N, IC, L) f32; w: (OC, IC, KS); b/gamma/beta: (OC,).

    The conv bias `b` is accepted for API parity with the PyTorch module but is NOT
    passed to the kernel: under training-mode BatchNorm it cancels exactly.
    """
    del b  # cancels under training-mode BN

    # ---- glue (fused under jit): pad + im2col, reshape & pad weights ----
    x_pad = jnp.pad(x, ((0, 0), (0, 0), (PAD, PAD)))
    taps = [x_pad[:, :, k:k + S * (L_OUT - 1) + 1:S] for k in range(KS)]  # each (N, IC, L_OUT)
    x_col = jnp.stack(taps, axis=0)                 # (KS, N, IC, L_OUT)
    x_col = x_col.transpose(2, 0, 1, 3)             # (IC, KS, N, L_OUT)
    x_col = x_col.reshape(IC * KS, M)               # rows ordered (ic major, ks minor)
    # Pad to an aligned (K_PAD, M_PAD) tile: zero rows/cols contribute nothing.
    x_col = jnp.pad(x_col, ((0, K_PAD - IC * KS), (0, M_PAD - M)))

    w2 = w.reshape(OC, IC * KS)
    w2 = jnp.pad(w2, ((0, 0), (0, K_PAD - IC * KS)))  # (OC, K_PAD)
    gb = jnp.stack([gamma, beta], axis=1)             # (OC, 2): one param DMA

    # No grid: single invocation, full-array VMEM blocks, no pipeline scaffolding.
    out2d = pl.pallas_call(
        convblock_kernel,
        out_shape=jax.ShapeDtypeStruct((OC, M_PAD), jnp.float32),
        in_specs=[
            pl.BlockSpec(memory_space=pltpu.MemorySpace.VMEM),
            pl.BlockSpec(memory_space=pltpu.MemorySpace.VMEM),
            pl.BlockSpec(memory_space=pltpu.MemorySpace.VMEM),
        ],
        out_specs=pl.BlockSpec(memory_space=pltpu.MemorySpace.VMEM),
    )(x_col, w2, gb)

    # Drop padded columns, then (OC, N*L_OUT) -> (N, OC, L_OUT) to match PyTorch NCL.
    return out2d[:, :M].reshape(OC, N, L_OUT).transpose(1, 0, 2)


def conv_block_reference(x, w, b, gamma, beta):
    """Pure-JAX reference mirroring the PyTorch module in training mode (bias included)."""
    y = jax.lax.conv_general_dilated(
        x, w, window_strides=(S,), padding=[(PAD, PAD)],
        dimension_numbers=("NCH", "OIH", "NCH"))
    y = y + b[None, :, None]
    mean = y.mean(axis=(0, 2), keepdims=True)
    var = ((y - mean) ** 2).mean(axis=(0, 2), keepdims=True)
    y_hat = (y - mean) / jnp.sqrt(var + EPS)
    y_hat = y_hat * gamma[None, :, None] + beta[None, :, None]
    return jnp.maximum(y_hat, 0.0)


if __name__ == "__main__":
    key = jax.random.PRNGKey(0)
    kx, kw, kb = jax.random.split(key, 3)

    x = jax.random.normal(kx, (N, IC, L), dtype=jnp.float32)

    # Deterministic parameter init (PyTorch-style uniform bounds for conv; BN default gamma=1, beta=0).
    bound = 1.0 / np.sqrt(IC * KS)
    w = jax.random.uniform(kw, (OC, IC, KS), minval=-bound, maxval=bound, dtype=jnp.float32)
    b = jax.random.uniform(kb, (OC,), minval=-bound, maxval=bound, dtype=jnp.float32)
    gamma = jnp.ones((OC,), dtype=jnp.float32)
    beta = jnp.zeros((OC,), dtype=jnp.float32)

    out = jax.block_until_ready(conv_block(x, w, b, gamma, beta))
    ref = jax.block_until_ready(conv_block_reference(x, w, b, gamma, beta))

    assert out.shape == (N, OC, L_OUT), out.shape
    np.testing.assert_allclose(np.asarray(out), np.asarray(ref), rtol=1e-4, atol=1e-4)
    print("KERNEL_OK")
</pallas_src>

<mosaic_0001>
module attributes {stable_mosaic.version = 11 : i64} {
  func.func @convblock_kernel(%arg0: memref<16x128xf32, #tpu.memory_space<vmem>>, %arg1: memref<8x16xf32, #tpu.memory_space<vmem>>, %arg2: memref<8x2xf32, #tpu.memory_space<vmem>>, %arg3: memref<8x128xf32, #tpu.memory_space<vmem>>) attributes {dimension_semantics = [], scalar_prefetch = 0 : i64, scratch_operands = 0 : i64, tpu.core_type = #tpu.core_type<tc>} {
    %c0 = arith.constant 0 : index
    %c0_0 = arith.constant 0 : index
    %0 = vector.load %arg1[%c0, %c0_0] : memref<8x16xf32, #tpu.memory_space<vmem>>, vector<8x16xf32>
    %c0_1 = arith.constant 0 : index
    %c0_2 = arith.constant 0 : index
    %1 = vector.load %arg0[%c0_1, %c0_2] : memref<16x128xf32, #tpu.memory_space<vmem>>, vector<16x128xf32>
    %cst = arith.constant dense<0.000000e+00> : vector<8x128xf32>
    %2 = tpu.matmul %0, %1, %cst {dimension_numbers = #tpu.dot_dimension_numbers<[1], [0], [0], [1], [0, 0, 1, 1], [], []>} : vector<8x16xf32>, vector<16x128xf32>, vector<8x128xf32> -> vector<8x128xf32>
    %cst_3 = arith.constant dense<0.000000e+00> : vector<8xf32>
    %3 = vector.multi_reduction <add>, %2, %cst_3 [1] : vector<8x128xf32> to vector<8xf32>
    %4 = vector.shape_cast %3 : vector<8xf32> to vector<8x1xf32>
    %5 = arith.mulf %2, %2 : vector<8x128xf32>
    %cst_4 = arith.constant dense<0.000000e+00> : vector<8xf32>
    %6 = vector.multi_reduction <add>, %5, %cst_4 [1] : vector<8x128xf32> to vector<8xf32>
    %7 = vector.shape_cast %6 : vector<8xf32> to vector<8x1xf32>
    %cst_5 = arith.constant 6.250000e-02 : f32
    %8 = vector.broadcast %cst_5 : f32 to vector<8x1xf32>
    %9 = arith.mulf %4, %8 : vector<8x1xf32>
    %cst_6 = arith.constant 6.250000e-02 : f32
    %10 = vector.broadcast %cst_6 : f32 to vector<8x1xf32>
    %11 = arith.mulf %7, %10 : vector<8x1xf32>
    %12 = arith.mulf %9, %9 : vector<8x1xf32>
    %13 = arith.subf %11, %12 : vector<8x1xf32>
    %cst_7 = arith.constant 0.000000e+00 : f32
    %14 = vector.broadcast %cst_7 : f32 to vector<8x1xf32>
    %15 = arith.maximumf %13, %14 : vector<8x1xf32>
    %c0_8 = arith.constant 0 : index
    %c0_9 = arith.constant 0 : index
    %16 = vector.load %arg2[%c0_8, %c0_9] : memref<8x2xf32, #tpu.memory_space<vmem>>, vector<8x2xf32>
    %17 = vector.extract_strided_slice %16 {offsets = [0, 0], sizes = [8, 1], strides = [1, 1]} : vector<8x2xf32> to vector<8x1xf32>
    %18 = vector.extract_strided_slice %16 {offsets = [0, 1], sizes = [8, 1], strides = [1, 1]} : vector<8x2xf32> to vector<8x1xf32>
    %cst_10 = arith.constant 9.99999974E-6 : f32
    %19 = vector.broadcast %cst_10 : f32 to vector<8x1xf32>
    %20 = arith.addf %15, %19 : vector<8x1xf32>
    %21 = math.rsqrt %20 : vector<8x1xf32>
    %22 = arith.mulf %17, %21 : vector<8x1xf32>
    %23 = arith.mulf %9, %22 : vector<8x1xf32>
    %24 = arith.subf %18, %23 : vector<8x1xf32>
    %25 = vector.broadcast %22 : vector<8x1xf32> to vector<8x128xf32>
    %26 = arith.mulf %2, %25 : vector<8x128xf32>
    %27 = vector.broadcast %24 : vector<8x1xf32> to vector<8x128xf32>
    %28 = arith.addf %26, %27 : vector<8x128xf32>
    %cst_11 = arith.constant 0.000000e+00 : f32
    %29 = vector.broadcast %cst_11 : f32 to vector<8x128xf32>
    %30 = arith.maximumf %28, %29 : vector<8x128xf32>
    %c0_12 = arith.constant 0 : index
    %c0_13 = arith.constant 0 : index
    %31 = vector.load %arg3[%c0_12, %c0_13] : memref<8x128xf32, #tpu.memory_space<vmem>>, vector<8x128xf32>
    tpu.vector_store %arg3[%c0_12, %c0_13], %30 {strides = array<i32>} : memref<8x128xf32, #tpu.memory_space<vmem>>, vector<8x128xf32>,
    return
  }
}

</mosaic_0001>

<llo_original>
// kernel: conv_block.1
$region0: #{conv_block.1}
  #allocation0 [shape = 'u32[]', space=smem, size = 0x4, offset = 0x4, fixed_abs, tag = 'smem constant byte address 0x4 - core index']
  #allocation1 [shape = 'u32[144,128]{1,0:T(1,128)}', space=vmem, size = 0x12000, scoped, tag = 'internal scratch']
  %s0 = inlined_call_operand.vmem [shape: f32[16,128], index: 0, kind: input, shape index: {}]
  %s1 = inlined_call_operand.vmem [shape: f32[8,16], index: 1, kind: input, shape index: {}]
  %s2 = inlined_call_operand.vmem [shape: f32[8,2], index: 2, kind: input, shape index: {}]
  %s3 = inlined_call_operand.vmem [shape: f32[8,128], index: 3, kind: output, shape index: {}]
  %s4 = sld [smem:[#allocation0]]
  $region22: #{conv_block.1} parent=0
    _
  %s6 = ssub.s32 1, %s4
  %s7 = scalar_select 0, %s6, %s4
  // Predicated region
  $region2: #{conv_block.1} parent=0 // pred_check
    _
  $region3: #{conv_block.1} parent=0 // pred_check_branch
    %9 = sbr.rel (0) target = $region5
  $region4: #{conv_block.1} parent=0 // pred_region
    _
  $region5: #{conv_block.1} parent=0 // pred_fallthru
    _
  // Predicated region
  $region6: #{conv_block.1} parent=0 // pred_check
    _
  $region7: #{conv_block.1} parent=0 // pred_check_branch
    %11 = sbr.rel (0) target = $region9
  $region8: #{conv_block.1} parent=0 // pred_region
    _
  $region9: #{conv_block.1} parent=0 // pred_fallthru
    _
  // Predicated region
  $region10: #{conv_block.1} parent=0 // pred_check
    _
  $region11: #{conv_block.1} parent=0 // pred_check_branch
    %13 = sbr.rel (0) target = $region13
  $region12: #{conv_block.1} parent=0 // pred_region
    _
  $region13: #{conv_block.1} parent=0 // pred_fallthru
    _
  %v14 = vld [vmem:[%s1] sm:$0xff]
  %v15 = vld [vmem:[%s0] sm:$0xff]
  %v16 = vld [vmem:[%s0 + $0x8] sm:$0xff]
  %vm17 = vcmask 130048
  %v19 = vsel %vm17, %v14, 0
  %21 = vmatprep.subr.mxu0 0.0
  %22 = vmatpush1.msra.mxu0 %v15
  %23 = vmatprep.subr.mxu0 0.0
  %24 = vmatpush1.msra.mxu0 %v16
  %25 = vmatprep.subr.mxu0 0.0
  %26 = vmatpush1.msra.mxu0 0.0
  %27 = vmatprep.subr.mxu0 0.0
  %28 = vmatpush1.msra.mxu0 0.0
  %29 = vmatprep.subr.mxu0 0.0
  %30 = vmatpush1.msra.mxu0 0.0
  %31 = vmatprep.subr.mxu0 0.0
  %32 = vmatpush1.msra.mxu0 0.0
  %33 = vmatprep.subr.mxu0 0.0
  %34 = vmatpush1.msra.mxu0 0.0
  %35 = vmatprep.subr.mxu0 0.0
  %36 = vmatpush1.msra.mxu0 0.0
  %37 = vmatprep.subr.mxu0 0.0
  %38 = vmatpush1.msra.mxu0 0.0
  %39 = vmatprep.subr.mxu0 0.0
  %40 = vmatpush1.msra.mxu0 0.0
  %41 = vmatprep.subr.mxu0 0.0
  %42 = vmatpush1.msra.mxu0 0.0
  %43 = vmatprep.subr.mxu0 0.0
  %44 = vmatpush1.msra.mxu0 0.0
  %45 = vmatprep.subr.mxu0 0.0
  %46 = vmatpush1.msra.mxu0 0.0
  %47 = vmatprep.subr.mxu0 0.0
  %48 = vmatpush1.msra.mxu0 0.0
  %49 = vmatprep.subr.mxu0 0.0
  %50 = vmatpush1.msra.mxu0 0.0
  %51 = vmatprep.subr.mxu0 0.0
  %52 = vmatpush1.msra.mxu0 0.0
  %53 = vmatprep.subr.mxu0 0.0
  %54 = vmatpush1.msra.mxu0 0.0
  %55 = vmatprep.subr.mxu0 0.0
  %56 = vmatpush1.msra.mxu0 0.0
  %57 = vmatprep.subr.mxu0 0.0
  %58 = vmatpush1.msra.mxu0 0.0
  %59 = vmatprep.subr.mxu0 0.0
  %60 = vmatpush1.msra.mxu0 0.0
  %61 = vmatprep.subr.mxu0 0.0
  %62 = vmatpush1.msra.mxu0 0.0
  %63 = vmatprep.subr.mxu0 0.0
  %64 = vmatpush1.msra.mxu0 0.0
  %65 = vmatprep.subr.mxu0 0.0
  %66 = vmatpush1.msra.mxu0 0.0
  %67 = vmatprep.subr.mxu0 0.0
  %68 = vmatpush1.msra.mxu0 0.0
  %69 = vmatprep.subr.mxu0 0.0
  %70 = vmatpush1.msra.mxu0 0.0
  %71 = vmatprep.subr.mxu0 0.0
  %72 = vmatpush1.msra.mxu0 0.0
  %73 = vmatprep.subr.mxu0 0.0
  %74 = vmatpush1.msra.mxu0 0.0
  %75 = vmatprep.subr.mxu0 0.0
  %76 = vmatpush1.msra.mxu0 0.0
  %77 = vmatprep.subr.mxu0 0.0
  %78 = vmatpush1.msra.mxu0 0.0
  %79 = vmatprep.subr.mxu0 0.0
  %80 = vmatpush1.msra.mxu0 0.0
  %81 = vmatprep.subr.mxu0 0.0
  %82 = vmatpush1.msra.mxu0 0.0
  %83 = vmatprep.subr.mxu0 0.0
  %84 = vmatpush1.msra.mxu0 0.0
  %85 = vmatprep.mubr.f32.mxu0 0.0
  %86 = vmatmul.mubr.f32.gmra.mrb[0].mxu0 %v19
  %v87 = vpop.f32.mrb[0].mxu0
  %v88 = vadd.f32 0.0, %v87
  %v89 = vpop.f32.mrb[0].mxu0
  %90 = vdwg.mxu0
  %91 = vadd.xlane.f32.xlu0 %v88
  %v92 = vpop.xlane.xlu0 %91
  %v93 = vmul.f32 %v88, %v88
  %94 = vadd.xlane.f32.xlu0 %v93
  %v95 = vpop.xlane.xlu0 %94
  %v96 = vmul.f32 %v92, 0.0625
  %v97 = vmul.f32 %v95, 0.0625
  %v98 = vmul.f32 %v96, %v96
  %v99 = vsub.f32 %v97, %v98
  %v100 = vmax.f32 %v99, 0.0
  %v101 = vld [vmem:[%s2] sm:$0xff]
  %v102 = vadd.f32 %v100, 1e-05
  %v103 = vrsqrt.pop %v102
  %v104 = vmul.f32 %v101, %v103
  %v105 = vmul.f32 %v96, %v104
  %107 = vrot.lane.b32.xlu0 %v105, 1
  %v108 = vpop.permute.xlu0 %107
  %v110 = vsub.f32 %v101, %v108
  %112 = vset.pattern.permute.xlu0 0
  %113 = vperm.xlu0 %112, %v104
  %v114 = vpop.permute.xlu0 %113
  %v116 = vmul.f32 %v88, %v114
  %118 = vset.pattern.permute.xlu0 1
  %119 = vperm.xlu0 %118, %v110
  %v120 = vpop.permute.xlu0 %119
  %v122 = vadd.f32 %v116, %v120
  %v123 = vmax.f32 %v122, 0.0
  %124 = vst [vmem:[%s3] sm:$0xff] %v123
  // Predicated region
  $region14: #{conv_block.1} parent=0 // pred_check
    _
  $region15: #{conv_block.1} parent=0 // pred_check_branch
    %126 = sbr.rel (0) target = $region17
  $region16: #{conv_block.1} parent=0 // pred_region
    _
  $region17: #{conv_block.1} parent=0 // pred_fallthru
    _
  // Predicated region
  $region18: #{conv_block.1} parent=0 // pred_check
    _
  $region19: #{conv_block.1} parent=0 // pred_check_branch
    %128 = sbr.rel (0) target = $region21
  $region20: #{conv_block.1} parent=0 // pred_region
    _
  $region21: #{conv_block.1} parent=0 // pred_fallthru
    _

</llo_original>
